<compile_context>
chip_gen: v7x
topology: tpu7x:2x2x1
jax: 0.10.0
libtpu: 0.0.40
codegen_flags: <defaults>
</compile_context>

<pallas_src>
import jax
import jax.numpy as jnp
import numpy as np
from jax.experimental import pallas as pl
from jax.experimental.pallas import tpu as pltpu


# ----------------------------------------------------------------------------
# The true Identity: no kernel, no HBM traffic.
# ----------------------------------------------------------------------------
def identity(x: jax.Array) -> jax.Array:
    """nn.Identity.forward(x) -> x.  Zero-cost alias; no pallas_call."""
    return x


# ----------------------------------------------------------------------------
# Optional materialized pass-through copy (Pallas), close to HBM roofline.
# ----------------------------------------------------------------------------
def _identity_kernel(x_ref, o_ref):
    # Straight VMEM tile copy.
    o_ref[...] = x_ref[...]


def _block_target_bytes() -> int:
    """Per-generation per-tile byte target (4 double-buffered tiles must fit
    the default scoped-VMEM budget: 16 MiB v5e, 32 MiB v6e, 32-of-64 MiB v7x)."""
    try:
        kind = jax.devices()[0].device_kind.lower()
    except Exception:
        kind = ""
    if "v6" in kind:
        return 6 * 1024 * 1024   # 4 * 6 MiB = 24 MiB  < 32 MiB default
    if "v7" in kind:
        return 4 * 1024 * 1024   # 4 * 4 MiB = 16 MiB  < 32 MiB default (64 MiB phys)
    return 2 * 1024 * 1024       # v5e / unknown: 4 * 2 MiB = 8 MiB < 16 MiB default


def _plan_view(x):
    """Choose a lane-dense 2-D view (rows, cols) and a row-tile size."""
    n = x.size
    itemsize = jnp.dtype(x.dtype).itemsize
    # Minimum sublane tile per dtype packing: f32 -> 8, bf16 -> 16, int8 -> 32.
    sub_min = max(8, 32 // itemsize)

    # Lane width: largest multiple-of-128 divisor of n, capped at 8192, so the
    # reshape is a free bitcast and every store is an unmasked full-lane vst.
    cols = 0
    if n % 128 == 0:
        for w in range(min(8192, n), 127, -128):
            if n % w == 0:
                cols = w
                break
    if cols == 0:
        # Awkward total size: collapse to (leading, last_dim).  The block
        # covers the full last dim so the (8,128) rule does not apply to it
        # (masked stores possible — perf hazard only, never correctness).
        cols = x.shape[-1] if x.ndim >= 1 else 1
        cols = max(cols, 1)
    rows = max(n // cols, 1)

    # Row tile: per-generation byte target, rounded to the sublane granule.
    target_rows = max(sub_min, _block_target_bytes() // max(cols * itemsize, 1))
    target_rows = max(sub_min, (target_rows // sub_min) * sub_min)

    if rows < 2 * sub_min:
        # Too small to split along sublanes: single full-height block.
        tile_rows = rows
    else:
        # Cap at half the rows so the grid always has >= 2 steps and v7x's
        # second TensorCore gets work; otherwise size tiles to the target.
        half_rows = max(sub_min, (rows // 2 // sub_min) * sub_min)
        tile_rows = max(sub_min, min(target_rows, half_rows))
    return rows, cols, tile_rows


def identity_copy(x: jax.Array) -> jax.Array:
    """Materialized pass-through copy: exactly 1 HBM read + 1 HBM write."""
    if x.size == 0:
        return x

    rows, cols, tile_rows = _plan_view(x)
    x2d = x.reshape(rows, cols)               # contiguous reshape: free bitcast
    itemsize = jnp.dtype(x.dtype).itemsize

    y2d = pl.pallas_call(
        _identity_kernel,
        out_shape=jax.ShapeDtypeStruct((rows, cols), x.dtype),
        grid_spec=pltpu.PrefetchScalarGridSpec(
            num_scalar_prefetch=0,
            grid=(pl.cdiv(rows, tile_rows),),
            in_specs=[pl.BlockSpec((tile_rows, cols), lambda i: (i, 0))],
            out_specs=pl.BlockSpec((tile_rows, cols), lambda i: (i, 0)),
        ),
        compiler_params=pltpu.CompilerParams(
            dimension_semantics=("parallel",),   # v7x: 2 TCs split the >=2-step grid
        ),
        # Pure memory traffic: tell XLA so it can overlap neighbouring compute.
        cost_estimate=pl.CostEstimate(
            flops=0, transcendentals=0, bytes_accessed=2 * x.size * itemsize),
    )(x2d)

    return y2d.reshape(x.shape)


if __name__ == "__main__":
    key = jax.random.PRNGKey(0)
    # Small NCHW-shaped input consistent with a CLIP-style feature map.
    x = jax.random.normal(key, (2, 4, 16, 16), dtype=jnp.float32)
    x_host = np.asarray(x)

    # True Identity path: zero-cost alias, exactly nn.Identity semantics.
    y = identity(x)
    assert y is x

    # Pallas materialized-copy path (demonstrates the kernel runs on TPU).
    y_copy = jax.block_until_ready(jax.jit(identity_copy)(x))
    assert y_copy.shape == x_host.shape and y_copy.dtype == x_host.dtype
    assert np.array_equal(np.asarray(y_copy), x_host)

    print("KERNEL_OK")
</pallas_src>

<mosaic_0001>
module attributes {stable_mosaic.version = 11 : i64} {
  func.func @_identity_kernel(%arg0: i32, %arg1: memref<1x2048xf32, #tpu.memory_space<vmem>>, %arg2: memref<1x2048xf32, #tpu.memory_space<vmem>>) attributes {dimension_semantics = [#tpu.dimension_semantics<parallel>], iteration_bounds = array<i64: 1>, scalar_prefetch = 0 : i64, scratch_operands = 0 : i64, tpu.core_type = #tpu.core_type<tc>, window_params = [{transform_indices = @transform_0, window_bounds = array<i64: 1, 2048>}, {transform_indices = @transform_1, window_bounds = array<i64: 1, 2048>}]} {
    %c0 = arith.constant 0 : index
    %c0_0 = arith.constant 0 : index
    %0 = vector.load %arg1[%c0, %c0_0] : memref<1x2048xf32, #tpu.memory_space<vmem>>, vector<1x2048xf32>
    %c0_1 = arith.constant 0 : index
    %c0_2 = arith.constant 0 : index
    %1 = vector.load %arg2[%c0_1, %c0_2] : memref<1x2048xf32, #tpu.memory_space<vmem>>, vector<1x2048xf32>
    tpu.vector_store %arg2[%c0_1, %c0_2], %0 {strides = array<i32>} : memref<1x2048xf32, #tpu.memory_space<vmem>>, vector<1x2048xf32>,
    return
  }
  func.func @transform_0(%arg0: i32) -> (i32, i32) {
    %c0_i32 = arith.constant 0 : i32
    %c0_i32_0 = arith.constant 0 : i32
    return %arg0, %c0_i32 : i32, i32
  }
  func.func @transform_1(%arg0: i32) -> (i32, i32) {
    %c0_i32 = arith.constant 0 : i32
    %c0_i32_0 = arith.constant 0 : i32
    return %arg0, %c0_i32 : i32, i32
  }
}

</mosaic_0001>

<llo_original>
// kernel: identity_copy.1
$region0: #{identity_copy.1}
  #allocation0 [shape = 'u32[]', space=smem, size = 0x4, offset = 0x4, fixed_abs, tag = 'smem constant byte address 0x4 - core index']
  #allocation1 [shape = 'u32[144,128]{1,0:T(1,128)}', space=vmem, size = 0x12000, scoped, tag = 'internal scratch']
  %s0 = inlined_call_operand.vmem [shape: f32[1,2048], index: 0, kind: input, shape index: {}]
  %s1 = inlined_call_operand.vmem [shape: f32[1,2048], index: 1, kind: output, shape index: {}]
  %s2 = sld [smem:[#allocation0]]
  $region14: #{identity_copy.1} parent=0
    _
  %s4 = ssub.s32 1, %s2
  %s5 = scalar_select 0, %s4, %s2
  // Predicated region
  $region2: #{identity_copy.1} parent=0 // pred_check
    _
  $region3: #{identity_copy.1} parent=0 // pred_check_branch
    %7 = sbr.rel (0) target = $region5
  $region4: #{identity_copy.1} parent=0 // pred_region
    _
  $region5: #{identity_copy.1} parent=0 // pred_fallthru
    _
  %v8 = vld [vmem:[%s0] sm:$0xff]
  %v9 = vld [vmem:[%s0 + $0x8] sm:$0xff]
  %10 = vst [vmem:[%s1] sm:$0xff] %v8
  %11 = vst [vmem:[%s1 + $0x8] sm:$0xff] %v9
  // Predicated region
  $region6: #{identity_copy.1} parent=0 // pred_check
    _
  $region7: #{identity_copy.1} parent=0 // pred_check_branch
    %13 = sbr.rel (0) target = $region9
  $region8: #{identity_copy.1} parent=0 // pred_region
    _
  $region9: #{identity_copy.1} parent=0 // pred_fallthru
    _
  // Predicated region
  $region10: #{identity_copy.1} parent=0 // pred_check
    _
  $region11: #{identity_copy.1} parent=0 // pred_check_branch
    %15 = sbr.rel (0) target = $region13
  $region12: #{identity_copy.1} parent=0 // pred_region
    _
  $region13: #{identity_copy.1} parent=0 // pred_fallthru
    _

</llo_original>
